<compile_context>
chip_gen: v5e
topology: v5e:2x2
jax: 0.10.0
libtpu: 0.0.40
codegen_flags: <defaults>
</compile_context>

<pallas_src>
import functools

import jax
import jax.numpy as jnp
from jax.experimental import pallas as pl
from jax.experimental.pallas import tpu as pltpu


def _physical_vmem_bytes(default=64 * 1024 * 1024):
    """Best-effort physical VMEM query; conservative (v7x-sized) fallback."""
    try:
        info = pltpu.get_tpu_info()
    except Exception:
        return default
    for name in ("vmem_capacity_bytes", "vmem_bytes", "vmem_size_bytes"):
        v = getattr(info, name, None)
        if isinstance(v, int) and v > 0:
            return v
    return default


def tsptw_init_embed_kernel(locs_ref, tw_ref, w_ref, out_ref, *, tw_normalize):
    """One grid step processes a block of TB batch elements.

    locs_ref: [TB, N, 2]  node coordinates (row 0 = depot)
    tw_ref:   [TB, N, 2]  time windows     (row 0 = depot)
    w_ref:    [8, E]      packed params:
                rows 0:2  init_embed weight^T (xy part)
                rows 2:4  init_embed weight^T (time-window part)
                rows 4:6  depot_embed weight^T
                row  6    init_embed bias
                row  7    depot_embed bias
    out_ref:  [TB, N, E]
    """
    TB, N, _ = locs_ref.shape
    E = out_ref.shape[-1]
    R = TB * N

    locs = locs_ref[...]                    # [TB, N, 2]
    tw = tw_ref[...]                        # [TB, N, 2]

    if tw_normalize:
        # One reciprocal per batch element, then a broadcast multiply over all
        # N rows.  Row 0's normalized value is never used (overwritten by the
        # depot select below).
        inv_close = 1.0 / tw[:, 0:1, 1:2]   # [TB, 1, 1]
        tw = tw * inv_close                 # [TB, N, 2]

    # Flatten (TB, N) -> rows so each matmul is one 2-D MXU pass over the
    # whole block (layout-free while N % 8 == 0).
    xy = locs.reshape(R, 2)
    twf = tw.reshape(R, 2)

    w_xy = w_ref[0:2, :]                    # [2, E]
    w_tw = w_ref[2:4, :]                    # [2, E]
    w_dep = w_ref[4:6, :]                   # [2, E]
    b_init = w_ref[6:7, :]                  # [1, E]
    b_dep = w_ref[7:8, :]                   # [1, E]

    # init_embed(cat([xy, tw_n], -1)) == xy @ W_xy + tw_n @ W_tw  (block-matmul
    # identity), computed over ALL rows; row 0 is replaced below.
    node = (jnp.dot(xy, w_xy, preferred_element_type=jnp.float32)
            + jnp.dot(twf, w_tw, preferred_element_type=jnp.float32)
            + b_init)                       # [R, E]
    node3 = node.reshape(TB, N, E)

    # Depot embedding only for the TB depot rows (no all-rows depot matmul,
    # no tile-sized depot temporary).
    depot_xy = locs[:, 0, :]                # [TB, 2]
    depot = (jnp.dot(depot_xy, w_dep, preferred_element_type=jnp.float32)
             + b_dep)                       # [TB, E]
    depot3 = depot.reshape(TB, 1, E)        # broadcast over N inside the where

    # Small (TB, N, 1) mask; jnp.where broadcasts it (and depot3) over E / N.
    is_depot = jax.lax.broadcasted_iota(jnp.int32, (TB, N, 1), 1) == 0
    out_ref[...] = jnp.where(is_depot, depot3, node3).astype(out_ref.dtype)


def tsptw_init_embedding(locs, time_windows, params, *, block_b=None,
                         tw_normalize=True, out_dtype=jnp.float32):
    """locs: [B, N, 2], time_windows: [B, N, 2] -> [B, N, E]."""
    B, N, _ = locs.shape
    E = params["w_init"].shape[0]           # torch Linear layout [out, in]

    # Pack the five tiny parameter tensors into one [8, E] buffer (exactly one
    # sublane tile) -> a single grid-invariant input ref.
    packed = jnp.concatenate(
        [params["w_init"].T.astype(jnp.float32),            # rows 0:4
         params["w_depot"].T.astype(jnp.float32),           # rows 4:6
         params["b_init"].reshape(1, E).astype(jnp.float32),  # row 6
         params["b_depot"].reshape(1, E).astype(jnp.float32)],  # row 7
        axis=0)                                              # [8, E]

    # Generation-aware VMEM budget: v5e/v6e have 128 MiB physical VMEM, v7x
    # only 64 MiB -> smaller tile cap and scoped-VMEM limit there.
    out_bytes = jnp.dtype(out_dtype).itemsize
    row_bytes = N * E * out_bytes
    vmem_phys = _physical_vmem_bytes()
    if vmem_phys >= 100 * 1024 * 1024:       # v5e / v6e
        tile_cap_bytes = 8 * 1024 * 1024
        vmem_limit = 64 * 1024 * 1024
    else:                                    # v7x or unknown: conservative
        tile_cap_bytes = 4 * 1024 * 1024
        vmem_limit = 40 * 1024 * 1024

    if block_b is None:
        # Target ~4096 flattened rows per step (~2 MiB output tile at E=128,
        # f32) to amortize the ~0.35 us per-grid-step overhead, capped by the
        # VMEM-derived tile budget and by B.
        target_rows = 4096
        block_b = max(1, target_rows // max(N, 1))
        block_b = min(block_b, max(1, tile_cap_bytes // max(row_bytes, 1)))
        block_b = min(block_b, B)
        if B >= 2:
            # Keep >= 2 grid steps so both v7x TensorCores get work.
            block_b = min(block_b, pl.cdiv(B, 2))
        block_b = max(1, block_b)
    grid_b = pl.cdiv(B, block_b)

    kernel = functools.partial(tsptw_init_embed_kernel, tw_normalize=tw_normalize)

    return pl.pallas_call(
        kernel,
        out_shape=jax.ShapeDtypeStruct((B, N, E), out_dtype),
        grid_spec=pltpu.PrefetchScalarGridSpec(
            num_scalar_prefetch=0,
            grid=(grid_b,),
            in_specs=[
                pl.BlockSpec((block_b, N, 2), lambda b: (b, 0, 0)),   # locs
                pl.BlockSpec((block_b, N, 2), lambda b: (b, 0, 0)),   # time_windows
                pl.BlockSpec((8, E), lambda b: (0, 0)),               # packed params
            ],
            out_specs=pl.BlockSpec((block_b, N, E), lambda b: (b, 0, 0)),
        ),
        compiler_params=pltpu.CompilerParams(
            # Batch axis is embarrassingly parallel -> v7x megacore shards it.
            dimension_semantics=("parallel",),
            vmem_limit_bytes=vmem_limit,
        ),
    )(locs, time_windows, packed)


def reference(locs, tw, params):
    """Pure-JAX reproduction of the PyTorch forward (tw_normalize=True)."""
    depot = locs[:, :1, :]
    customers = locs[:, 1:, :]
    tw_n = tw[:, 1:] / tw[:, :1, 1:]
    dep_emb = depot @ params["w_depot"].T + params["b_depot"]
    feats = jnp.concatenate([customers, tw_n], axis=-1)
    node_emb = feats @ params["w_init"].T + params["b_init"]
    return jnp.concatenate([dep_emb, node_emb], axis=-2)


if __name__ == "__main__":
    B, N, E = 4, 8, 128        # batch, nodes (incl. depot), embed_dim (lane-dense)
    node_dim = 4

    key = jax.random.PRNGKey(0)
    k_locs, k_tws, k_tww, k1, k2, k3, k4 = jax.random.split(key, 7)

    # Inputs: locs in [0,1)^2; time windows strictly positive (depot end > 0).
    locs = jax.random.uniform(k_locs, (B, N, 2), dtype=jnp.float32)
    tw_start = jax.random.uniform(k_tws, (B, N, 1), dtype=jnp.float32)
    tw_width = jax.random.uniform(k_tww, (B, N, 1), dtype=jnp.float32) + 0.5
    time_windows = jnp.concatenate([tw_start, tw_start + tw_width], axis=-1)

    # Deterministic synthetic parameters (torch Linear layout: [out, in]).
    params = {
        "w_init": 0.1 * jax.random.normal(k1, (E, node_dim), dtype=jnp.float32),
        "b_init": 0.1 * jax.random.normal(k2, (E,), dtype=jnp.float32),
        "w_depot": 0.1 * jax.random.normal(k3, (E, 2), dtype=jnp.float32),
        "b_depot": 0.1 * jax.random.normal(k4, (E,), dtype=jnp.float32),
    }

    ref = reference(locs, time_windows, params)

    # Multi-step grid (block_b=2 -> grid=(2,)): exercises the batched path and
    # the parallel batch axis.
    out = jax.block_until_ready(
        tsptw_init_embedding(locs, time_windows, params, block_b=2))
    assert out.shape == (B, N, E), out.shape
    assert jnp.allclose(out, ref, atol=1e-5, rtol=1e-5), "mismatch (block_b=2)"

    # Default block_b heuristic (generation-aware caps + >=2 grid steps).
    out_auto = jax.block_until_ready(
        tsptw_init_embedding(locs, time_windows, params))
    assert out_auto.shape == (B, N, E), out_auto.shape
    assert jnp.allclose(out_auto, ref, atol=1e-5, rtol=1e-5), "mismatch (auto)"

    # Ragged last block (B=3 not divisible by block_b=2): padded reads /
    # masked writes on the final grid step.
    out2 = jax.block_until_ready(
        tsptw_init_embedding(locs[:3], time_windows[:3], params, block_b=2))
    assert out2.shape == (3, N, E), out2.shape
    assert jnp.allclose(out2, ref[:3], atol=1e-5, rtol=1e-5), "mismatch (ragged)"

    print("KERNEL_OK")
</pallas_src>

<mosaic_0001>
module attributes {stable_mosaic.version = 11 : i64} {
  func.func @tsptw_init_embed_kernel(%arg0: i32, %arg1: memref<2x8x2xf32, #tpu.memory_space<vmem>>, %arg2: memref<2x8x2xf32, #tpu.memory_space<vmem>>, %arg3: memref<8x128xf32, #tpu.memory_space<vmem>>, %arg4: memref<2x8x128xf32, #tpu.memory_space<vmem>>) attributes {dimension_semantics = [#tpu.dimension_semantics<parallel>], iteration_bounds = array<i64: 2>, scalar_prefetch = 0 : i64, scratch_operands = 0 : i64, tpu.core_type = #tpu.core_type<tc>, window_params = [{transform_indices = @transform_0, window_bounds = array<i64: 2, 8, 2>}, {transform_indices = @transform_1, window_bounds = array<i64: 2, 8, 2>}, {pipeline_mode = #tpu.pipeline_mode<synchronous>, transform_indices = @transform_2, window_bounds = array<i64: 8, 128>}, {transform_indices = @transform_3, window_bounds = array<i64: 2, 8, 128>}]} {
    %c0 = arith.constant 0 : index
    %c0_0 = arith.constant 0 : index
    %c0_1 = arith.constant 0 : index
    %0 = vector.load %arg1[%c0, %c0_0, %c0_1] : memref<2x8x2xf32, #tpu.memory_space<vmem>>, vector<2x8x2xf32>
    %c0_2 = arith.constant 0 : index
    %c0_3 = arith.constant 0 : index
    %c0_4 = arith.constant 0 : index
    %1 = vector.load %arg2[%c0_2, %c0_3, %c0_4] : memref<2x8x2xf32, #tpu.memory_space<vmem>>, vector<2x8x2xf32>
    %2 = vector.extract_strided_slice %1 {offsets = [0, 0, 1], sizes = [2, 1, 1], strides = [1, 1, 1]} : vector<2x8x2xf32> to vector<2x1x1xf32>
    %cst = arith.constant 1.000000e+00 : f32
    %3 = vector.broadcast %cst : f32 to vector<2x1x1xf32>
    %4 = arith.divf %3, %2 : vector<2x1x1xf32>
    %5 = vector.broadcast %4 : vector<2x1x1xf32> to vector<2x8x2xf32>
    %6 = arith.mulf %1, %5 : vector<2x8x2xf32>
    %7 = vector.shape_cast %0 : vector<2x8x2xf32> to vector<16x2xf32>
    %8 = vector.shape_cast %6 : vector<2x8x2xf32> to vector<16x2xf32>
    %c0_5 = arith.constant 0 : index
    %c0_6 = arith.constant 0 : index
    %9 = vector.load %arg3[%c0_5, %c0_6] : memref<8x128xf32, #tpu.memory_space<vmem>>, vector<2x128xf32>
    %c2 = arith.constant 2 : index
    %c0_7 = arith.constant 0 : index
    %10 = vector.load %arg3[%c2, %c0_7] : memref<8x128xf32, #tpu.memory_space<vmem>>, vector<2x128xf32>
    %c4 = arith.constant 4 : index
    %c0_8 = arith.constant 0 : index
    %11 = vector.load %arg3[%c4, %c0_8] : memref<8x128xf32, #tpu.memory_space<vmem>>, vector<2x128xf32>
    %c6 = arith.constant 6 : index
    %c0_9 = arith.constant 0 : index
    %12 = vector.load %arg3[%c6, %c0_9] : memref<8x128xf32, #tpu.memory_space<vmem>>, vector<1x128xf32>
    %c7 = arith.constant 7 : index
    %c0_10 = arith.constant 0 : index
    %13 = vector.load %arg3[%c7, %c0_10] : memref<8x128xf32, #tpu.memory_space<vmem>>, vector<1x128xf32>
    %cst_11 = arith.constant dense<0.000000e+00> : vector<16x128xf32>
    %14 = tpu.matmul %7, %9, %cst_11 {dimension_numbers = #tpu.dot_dimension_numbers<[1], [0], [0], [1], [0, 0, 1, 1], [], []>} : vector<16x2xf32>, vector<2x128xf32>, vector<16x128xf32> -> vector<16x128xf32>
    %cst_12 = arith.constant dense<0.000000e+00> : vector<16x128xf32>
    %15 = tpu.matmul %8, %10, %cst_12 {dimension_numbers = #tpu.dot_dimension_numbers<[1], [0], [0], [1], [0, 0, 1, 1], [], []>} : vector<16x2xf32>, vector<2x128xf32>, vector<16x128xf32> -> vector<16x128xf32>
    %16 = arith.addf %14, %15 : vector<16x128xf32>
    %17 = vector.broadcast %12 : vector<1x128xf32> to vector<16x128xf32>
    %18 = arith.addf %16, %17 : vector<16x128xf32>
    %19 = vector.shape_cast %18 : vector<16x128xf32> to vector<2x8x128xf32>
    %20 = vector.extract_strided_slice %0 {offsets = [0, 0, 0], sizes = [2, 1, 2], strides = [1, 1, 1]} : vector<2x8x2xf32> to vector<2x1x2xf32>
    %21 = vector.shape_cast %20 : vector<2x1x2xf32> to vector<2x2xf32>
    %cst_13 = arith.constant dense<0.000000e+00> : vector<2x128xf32>
    %22 = tpu.matmul %21, %11, %cst_13 {dimension_numbers = #tpu.dot_dimension_numbers<[1], [0], [0], [1], [0, 0, 1, 1], [], []>} : vector<2x2xf32>, vector<2x128xf32>, vector<2x128xf32> -> vector<2x128xf32>
    %23 = vector.broadcast %13 : vector<1x128xf32> to vector<2x128xf32>
    %24 = arith.addf %22, %23 : vector<2x128xf32>
    %25 = vector.shape_cast %24 : vector<2x128xf32> to vector<2x1x128xf32>
    %26 = tpu.iota {dimensions = array<i32: 1>} : vector<2x8x1xi32>
    %c0_i32 = arith.constant 0 : i32
    %27 = vector.broadcast %c0_i32 : i32 to vector<2x8x1xi32>
    %28 = arith.cmpi eq, %26, %27 : vector<2x8x1xi32>
    %29 = vector.shape_cast %28 : vector<2x8x1xi1> to vector<2x8x1xi1>
    %30 = vector.broadcast %29 : vector<2x8x1xi1> to vector<2x8x128xi1>
    %31 = vector.shape_cast %25 : vector<2x1x128xf32> to vector<2x1x128xf32>
    %32 = vector.broadcast %31 : vector<2x1x128xf32> to vector<2x8x128xf32>
    %33 = arith.select %30, %32, %19 : vector<2x8x128xi1>, vector<2x8x128xf32>
    %c0_14 = arith.constant 0 : index
    %c0_15 = arith.constant 0 : index
    %c0_16 = arith.constant 0 : index
    %34 = vector.load %arg4[%c0_14, %c0_15, %c0_16] : memref<2x8x128xf32, #tpu.memory_space<vmem>>, vector<2x8x128xf32>
    tpu.vector_store %arg4[%c0_14, %c0_15, %c0_16], %33 {strides = array<i32>} : memref<2x8x128xf32, #tpu.memory_space<vmem>>, vector<2x8x128xf32>,
    return
  }
  func.func @transform_0(%arg0: i32) -> (i32, i32, i32) {
    %c0_i32 = arith.constant 0 : i32
    %c0_i32_0 = arith.constant 0 : i32
    %c0_i32_1 = arith.constant 0 : i32
    return %arg0, %c0_i32, %c0_i32_0 : i32, i32, i32
  }
  func.func @transform_1(%arg0: i32) -> (i32, i32, i32) {
    %c0_i32 = arith.constant 0 : i32
    %c0_i32_0 = arith.constant 0 : i32
    %c0_i32_1 = arith.constant 0 : i32
    return %arg0, %c0_i32, %c0_i32_0 : i32, i32, i32
  }
  func.func @transform_2(%arg0: i32) -> (i32, i32) {
    %c0_i32 = arith.constant 0 : i32
    %c0_i32_0 = arith.constant 0 : i32
    %c0_i32_1 = arith.constant 0 : i32
    return %c0_i32, %c0_i32_0 : i32, i32
  }
  func.func @transform_3(%arg0: i32) -> (i32, i32, i32) {
    %c0_i32 = arith.constant 0 : i32
    %c0_i32_0 = arith.constant 0 : i32
    %c0_i32_1 = arith.constant 0 : i32
    return %arg0, %c0_i32, %c0_i32_0 : i32, i32, i32
  }
}

</mosaic_0001>

<llo_original>
// kernel: tpu_custom_call.1
$region0: #{tpu_custom_call.1}
  #allocation0 [shape = 'u32[]', space=smem, size = 0x4, offset = 0x4, fixed_abs, tag = 'smem constant byte address 0x4 - core index']
  #allocation1 [shape = 'u32[72,128]{1,0:T(1,128)}', space=vmem, size = 0x9000, scoped, tag = 'internal scratch']
  %s0 = inlined_call_operand.vmem [shape: f32[4,8,2], index: 0, kind: input, shape index: {}]
  %s1 = inlined_call_operand.vmem [shape: f32[4,8,2], index: 1, kind: input, shape index: {}]
  %s2 = inlined_call_operand.vmem [shape: f32[8,128], index: 2, kind: input, shape index: {}]
  %s3 = inlined_call_operand.hbm [shape: f32[4,8,128], index: 3, kind: output, shape index: {}]
  %s4 = sld [smem:[#allocation0]]
  $region45: #{tpu_custom_call.1} parent=0
    _
  %s6 = ssub.s32 1, %s4
  %s7 = scalar_select 0, %s6, %s4
  $region1: #{tpu_custom_call.1} parent=0
    #allocation2 [shape = 'u8[16384]{0}', space=vmem, size = 0x4000, scoped, tag = 'output window, operand 0']
    #allocation3 [shape = 's32[2]{0}', space=sflag, size = 0x8, scoped, tag = 'scoped memory for tpu_custom_call.1']
    %8 = vsyncpa [#allocation3], 0
    %s9 = scalar_lea.sflag [#allocation3], 1
    %10 = vsyncpa %s9, 0
    loop: start=0, step=1, limit=4
    $region2: #{tpu_custom_call.1} parent=1 // loop_pre_header
      _
    $region3: #{tpu_custom_call.1} parent=1 // loop_header
      %s12 = sphi 0, %s16
      %p13 = scmp.ge.s32.totalorder %s12, 4
      %s22 = sphi 0, %s24
      %s25 = sphi 0, %s22
      %s26 = sphi 0, %s25
      %s42 = sphi 0, %s26
      %s48 = sphi 0, %s50
      %s51 = sphi 0, %s48
      %s52 = sphi 0, %s51
      %s68 = sphi 0, %s52
      %s72 = sphi 0, %s72
      %s74 = sphi 0, %s72
      %s75 = sphi 0, %s74
      %s89 = sphi 0, %s75
      %s95 = sphi 0, %s97
      %s98 = sphi 0, %s95
      %s99 = sphi 0, %s98
      %s115 = sphi 0, %s99
    $region4: #{tpu_custom_call.1} parent=1 // loop_header_branch
      %15 = sbr.rel (%p13) target = $region8
    $region5: #{tpu_custom_call.1} parent=1 // loop_body
      %s17 = ssub.s32 %s12, 1
      %s18 = ssub.s32 %s12, 2
      %s19 = sadd.s32 %s12, 1
      %s20 = ssub.s32 %s12, %s19
      %p21 = scmp.eq.s32.totalorder %s20, 0
      %s23 = sadd.s32 %s22, 1
      %s24 = scalar_select %p21, %s22, %s23
      %p27 = pneg %p21
      %p28 = scmp.eq.s32.totalorder %s12, 1
      %p29 = por %p27, %p28
      %p30 = scmp.ne.s32.totalorder %s22, %s25
      %p31 = scmp.eq.s32.totalorder %s12, 0
      %p32 = por %p30, %p31
      %p33 = scmp.ne.s32.totalorder %s22, %s25
      %p34 = scmp.eq.s32.totalorder %s17, 1
      %p35 = por %p33, %p34
      %p36 = scmp.ne.s32.totalorder %s25, %s26
      %p37 = scmp.eq.s32.totalorder %s17, 0
      %p38 = por %p36, %p37
      %p39 = scmp.ne.s32.totalorder %s25, %s26
      %p40 = scmp.eq.s32.totalorder %s18, 1
      %p41 = por %p39, %p40
      %p43 = scmp.ne.s32.totalorder %s26, %s42
      %p44 = scmp.eq.s32.totalorder %s18, 0
      %p45 = por %p43, %p44
      %s46 = ssub.s32 %s12, %s19
      %p47 = scmp.eq.s32.totalorder %s46, 0
      %s49 = sadd.s32 %s48, 1
      %s50 = scalar_select %p47, %s48, %s49
      %p53 = pneg %p47
      %p54 = scmp.eq.s32.totalorder %s12, 1
      %p55 = por %p53, %p54
      %p56 = scmp.ne.s32.totalorder %s48, %s51
      %p57 = scmp.eq.s32.totalorder %s12, 0
      %p58 = por %p56, %p57
      %p59 = scmp.ne.s32.totalorder %s48, %s51
      %p60 = scmp.eq.s32.totalorder %s17, 1
      %p61 = por %p59, %p60
      %p62 = scmp.ne.s32.totalorder %s51, %s52
      %p63 = scmp.eq.s32.totalorder %s17, 0
      %p64 = por %p62, %p63
      %p65 = scmp.ne.s32.totalorder %s51, %s52
      %p66 = scmp.eq.s32.totalorder %s18, 1
      %p67 = por %p65, %p66
      %p69 = scmp.ne.s32.totalorder %s52, %s68
      %p70 = scmp.eq.s32.totalorder %s18, 0
      %p71 = por %p69, %p70
      %s73 = sadd.s32 %s72, 1
      %p76 = scmp.eq.s32.totalorder %s12, 1
      %p77 = scmp.ne.s32.totalorder %s72, %s74
      %p78 = scmp.eq.s32.totalorder %s12, 0
      %p79 = por %p77, %p78
      %p80 = scmp.ne.s32.totalorder %s72, %s74
      %p81 = scmp.eq.s32.totalorder %s17, 1
      %p82 = por %p80, %p81
      %p83 = scmp.ne.s32.totalorder %s74, %s75
      %p84 = scmp.eq.s32.totalorder %s17, 0
      %p85 = por %p83, %p84
      %p86 = scmp.ne.s32.totalorder %s74, %s75
      %p87 = scmp.eq.s32.totalorder %s18, 1
      %p88 = por %p86, %p87
      %p90 = scmp.ne.s32.totalorder %s75, %s89
      %p91 = scmp.eq.s32.totalorder %s18, 0
      %p92 = por %p90, %p91
      %s93 = ssub.s32 %s12, %s19
      %p94 = scmp.eq.s32.totalorder %s93, 0
      %s96 = sadd.s32 %s95, 1
      %s97 = scalar_select %p94, %s95, %s96
      %p100 = pneg %p94
      %p101 = scmp.eq.s32.totalorder %s12, 1
      %p102 = por %p100, %p101
      %p103 = scmp.ne.s32.totalorder %s95, %s98
      %p104 = scmp.eq.s32.totalorder %s12, 0
      %p105 = por %p103, %p104
      %p106 = scmp.ne.s32.totalorder %s95, %s98
      %p107 = scmp.eq.s32.totalorder %s17, 1
      %p108 = por %p106, %p107
      %p109 = scmp.ne.s32.totalorder %s98, %s99
      %p110 = scmp.eq.s32.totalorder %s17, 0
      %p111 = por %p109, %p110
      %p112 = scmp.ne.s32.totalorder %s98, %s99
      %p113 = scmp.eq.s32.totalorder %s18, 1
      %p114 = por %p112, %p113
      %p116 = scmp.ne.s32.totalorder %s99, %s115
      %p117 = scmp.eq.s32.totalorder %s18, 0
      %p118 = por %p116, %p117
      %p119 = scmp.le.s32.totalorder 1, %s12
      %p120 = scmp.lt.s32.totalorder %s12, 3
      %p121 = pnand %p119, %p120
      %p122 = pneg %p121
      // Predicated region
      $region9: #{tpu_custom_call.1} parent=5 // pred_check
        _
      $region10: #{tpu_custom_call.1} parent=5 // pred_check_branch
        %124 = sbr.rel (%p121) target = $region12
      $region11: #{tpu_custom_call.1} parent=5 // pred_region
        %s125 = ssub.s32 %s12, 1
        // Predicated region
        $region13: #{tpu_custom_call.1} parent=11 // pred_check
          %p126 = pneg %p85
        $region14: #{tpu_custom_call.1} parent=11 // pred_check_branch
          %128 = sbr.rel (%p126) target = $region16
        $region15: #{tpu_custom_call.1} parent=11 // pred_region
          _
        $region16: #{tpu_custom_call.1} parent=11 // pred_fallthru
          _
      $region12: #{tpu_custom_call.1} parent=5 // pred_fallthru
        _
      %p129 = scmp.lt.s32.totalorder %s12, 2
      // Predicated region
      $region17: #{tpu_custom_call.1} parent=5 // pred_check
        %p130 = pneg %p129
      $region18: #{tpu_custom_call.1} parent=5 // pred_check_branch
        %132 = sbr.rel (%p130) target = $region20
      $region19: #{tpu_custom_call.1} parent=5 // pred_region
        // Predicated region
        $region21: #{tpu_custom_call.1} parent=19 // pred_check
          %p133 = pneg %p32
        $region22: #{tpu_custom_call.1} parent=19 // pred_check_branch
          %135 = sbr.rel (%p133) target = $region24
        $region23: #{tpu_custom_call.1} parent=19 // pred_region
          %s136 = smul.u32 2, %s12
          %p137 = scmp.lt.s32.totalorder %s136, 3
          %s138 = scalar_select %p137, %s136, 3
          %s139 = smul.addr %s138, 8
          %s140 = scalar_lea.vmem %s0, %s139
          %s141 = smul.u32 2, %s12
        $region24: #{tpu_custom_call.1} parent=19 // pred_fallthru
          _
        // Predicated region
        $region25: #{tpu_custom_call.1} parent=19 // pred_check
          %p142 = pneg %p58
        $region26: #{tpu_custom_call.1} parent=19 // pred_check_branch
          %144 = sbr.rel (%p142) target = $region28
        $region27: #{tpu_custom_call.1} parent=19 // pred_region
          %s145 = smul.u32 2, %s12
          %p146 = scmp.lt.s32.totalorder %s145, 3
          %s147 = scalar_select %p146, %s145, 3
          %s148 = smul.addr %s147, 8
          %s149 = scalar_lea.vmem %s1, %s148
          %s150 = smul.u32 2, %s12
        $region28: #{tpu_custom_call.1} parent=19 // pred_fallthru
          _
      $region20: #{tpu_custom_call.1} parent=5 // pred_fallthru
        _
      %p151 = scmp.le.s32.totalorder 1, %s12
      %p152 = scmp.lt.s32.totalorder %s12, 3
      %p153 = pnand %p151, %p152
      %p154 = pneg %p153
      // Predicated region
      $region29: #{tpu_custom_call.1} parent=5 // pred_check
        _
      $region30: #{tpu_custom_call.1} parent=5 // pred_check_branch
        %156 = sbr.rel (%p153) target = $region32
      $region31: #{tpu_custom_call.1} parent=5 // pred_region
        %s157 = ssub.s32 %s12, 1
        %s158 = smul.u32 2, %s17
        %p159 = scmp.lt.s32.totalorder %s158, 3
        %s160 = scalar_select %p159, %s158, 3
        %s161 = smul.addr %s160, 8
        %s162 = scalar_lea.vmem %s0, %s161
        %p163 = pneg %p38
        %p164 = pneg %p35
        %s165 = smul.u32 2, %s17
        %p166 = scmp.lt.s32.totalorder %s165, 3
        %s167 = scalar_select %p166, %s165, 3
        %s168 = smul.addr %s167, 8
        %s169 = scalar_lea.vmem %s1, %s168
        %p170 = pneg %p64
        %p171 = pneg %p61
        %p172 = pneg %p85
        %p173 = pneg %p82
        %p174 = pneg %p111
        %p175 = pneg %p108
        %s176 = sand.u32 %s98, 1
        %s177 = scalar_lea.sflag [#allocation3], %s176
        %s178 = sand.u32 %s98, 1
        %s179 = smul.addr %s178, 16
        %s180 = scalar_lea.vmem [#allocation2], %s179
        %s181 = smul.u32 2, %s17
        %p182 = scmp.lt.s32.totalorder %s181, 3
        %s183 = scalar_select %p182, %s181, 3
        %s184 = smul.addr %s183, 8
        %s185 = scalar_lea.vmem %s0, %s184
        %s186 = smul.u32 2, %s17
        %s187 = smul.u32 2, %s17
        %p188 = scmp.lt.s32.totalorder %s187, 3
        %s189 = scalar_select %p188, %s187, 3
        %s190 = smul.addr %s189, 8
        %s191 = scalar_lea.vmem %s1, %s190
        %s192 = smul.u32 2, %s17
        %s193 = smul.u32 2, %s17
        %v194 = vld [vmem:[%s185] sm:$0xff]
        %v195 = vld [vmem:[%s185 + $0x8] sm:$0xff]
        %v196 = vld [vmem:[%s191] sm:$0xff]
        %v197 = vld [vmem:[%s191 + $0x8] sm:$0xff]
        %v198 = vrcp.pop %v196
        %v199 = vmul.f32 %v196, %v198
        %v200 = vsub.f32 1.0, %v199
        %v201 = vmul.f32 %v198, %v200
        %v202 = vadd.f32 %v198, %v201
        %vm203 = vweird.f32 %v196
        %vm204 = vweird.f32 %v198
        %vm205 = vmor %vm203, %vm204
        %v206 = vsel %vm205, %v198, %v202
        %v207 = vand.u32 2147483647, %v196
        %vm208 = vcmp.eq.f32.partialorder %v207, 8.507059e+37
        %v209 = vand.u32 %v196, 2147483648
        %v210 = vor.u32 1.1754944e-38, %v209
        %v211 = vsel %vm208, %v210, %v206
        %v212 = vmul.f32 1.0, %v211
        %v213 = vrcp.pop %v197
        %v214 = vmul.f32 %v197, %v213
        %v215 = vsub.f32 1.0, %v214
        %v216 = vmul.f32 %v213, %v215
        %v217 = vadd.f32 %v213, %v216
        %vm218 = vweird.f32 %v197
        %vm219 = vweird.f32 %v213
        %vm220 = vmor %vm218, %vm219
        %v221 = vsel %vm220, %v213, %v217
        %v222 = vand.u32 2147483647, %v197
        %vm223 = vcmp.eq.f32.partialorder %v222, 8.507059e+37
        %v224 = vand.u32 %v197, 2147483648
        %v225 = vor.u32 1.1754944e-38, %v224
        %v226 = vsel %vm223, %v225, %v221
        %v227 = vmul.f32 1.0, %v226
        %230 = vrot.lane.b32.xlu0 %v212, 127
        %v231 = vpop.permute.xlu0 %230
        %232 = vrot.lane.b32.xlu0 %v227, 127
        %v233 = vpop.permute.xlu0 %232
        %s234 = vtos %v231
        %v235 = vstv %s234
        %s237 = vtos %v233
        %v238 = vstv %s237
        %v240 = vmul.f32 %v196, %v235
        %v241 = vmul.f32 %v197, %v238
        %v242 = vld [vmem:[%s2] sm:$0x3]
        %v243 = vld [vmem:[%s2 + $0x2] sm:$0x3]
        %v244 = vld [vmem:[%s2 + $0x4] sm:$0x3]
        %v245 = vld [vmem:[%s2 + $0x6] sm:$0x1]
        %v246 = vld [vmem:[%s2 + $0x7] sm:$0x1]
        %vm247 = vcmask 15360
        %v249 = vsel %vm247, %v240, 0
        %v252 = vsel %vm247, %v241, 0
        %vm254 = vcmask 1041408
        %v256 = vsel %vm254, %v243, 0
        %258 = vmatpush.msra.mxu0 0.0
        %259 = vmatpush.msra.mxu0 0.0
        %260 = vmatpush.msra.mxu0 0.0
        %261 = vmatpush.msra.mxu0 0.0
        %262 = vmatpush.msra.mxu0 0.0
        %263 = vmatpush.msra.mxu0 0.0
        %264 = vmatpush.msra.mxu0 0.0
        %265 = vmatpush.msra.mxu0 0.0
        %266 = vmatpush.msra.mxu0 0.0
        %267 = vmatpush.msra.mxu0 0.0
        %268 = vmatpush.msra.mxu0 0.0
        %269 = vmatpush.msra.mxu0 0.0
        %270 = vmatpush.msra.mxu0 0.0
        %271 = vmatpush.msra.mxu0 0.0
        %272 = vmatpush.msra.mxu0 0.0
        %273 = vmatpush.msra.mxu0 %v256
        %274 = vmatmul.f32.gmra.mxu0 %v249
        %v275 = vpop.f32.mrf.mxu0
        %v276 = vadd.f32 0.0, %v275
        %277 = vmatmul.f32.gmra.mxu0 %v252
        %v278 = vpop.f32.mrf.mxu0
        %v279 = vadd.f32 0.0, %v278
        %280 = vdwg.mxu0
        %v282 = vsel %vm247, %v194, 0
        %v285 = vsel %vm247, %v195, 0
        %v288 = vsel %vm254, %v242, 0
        %290 = vmatpush.msra.mxu0 0.0
        %291 = vmatpush.msra.mxu0 0.0
        %292 = vmatpush.msra.mxu0 0.0
        %293 = vmatpush.msra.mxu0 0.0
        %294 = vmatpush.msra.mxu0 0.0
        %295 = vmatpush.msra.mxu0 0.0
        %296 = vmatpush.msra.mxu0 0.0
        %297 = vmatpush.msra.mxu0 0.0
        %298 = vmatpush.msra.mxu0 0.0
        %299 = vmatpush.msra.mxu0 0.0
        %300 = vmatpush.msra.mxu0 0.0
        %301 = vmatpush.msra.mxu0 0.0
        %302 = vmatpush.msra.mxu0 0.0
        %303 = vmatpush.msra.mxu0 0.0
        %304 = vmatpush.msra.mxu0 0.0
        %305 = vmatpush.msra.mxu0 %v288
        %306 = vmatmul.f32.gmra.mxu0 %v282
        %v307 = vpop.f32.mrf.mxu0
        %v308 = vadd.f32 %v276, %v307
        %309 = vmatmul.f32.gmra.mxu0 %v285
        %v310 = vpop.f32.mrf.mxu0
        %v311 = vadd.f32 %v279, %v310
        %312 = vdwg.mxu0
        %v313 = vperm.slane %v245, 0
        %v314 = vadd.f32 %v308, %v313
        %v315 = vadd.f32 %v311, %v313
        %v316 = vperm.slane %v246, 0
        %v317 = vrot.slane %v195, 7
        %vm318 = vcmask 1041409
        %v319 = vsel %vm318, %v317, %v194
        %v320 = vsel %vm247, %v319, 0
        %v323 = vsel %vm254, %v244, 0
        %325 = vmatpush.msra.mxu0 0.0
        %326 = vmatpush.msra.mxu0 0.0
        %327 = vmatpush.msra.mxu0 0.0
        %328 = vmatpush.msra.mxu0 0.0
        %329 = vmatpush.msra.mxu0 0.0
        %330 = vmatpush.msra.mxu0 0.0
        %331 = vmatpush.msra.mxu0 0.0
        %332 = vmatpush.msra.mxu0 0.0
        %333 = vmatpush.msra.mxu0 0.0
        %334 = vmatpush.msra.mxu0 0.0
        %335 = vmatpush.msra.mxu0 0.0
        %336 = vmatpush.msra.mxu0 0.0
        %337 = vmatpush.msra.mxu0 0.0
        %338 = vmatpush.msra.mxu0 0.0
        %339 = vmatpush.msra.mxu0 0.0
        %340 = vmatpush.msra.mxu0 %v323
        %341 = vmatmul.f32.gmra.mxu0 %v320
        %v342 = vpop.f32.mrf.mxu0
        %v343 = vadd.f32 %v316, %v342
        %344 = vdwg.mxu0
        %v346 = vrot.slane %v343, 1
        %v347 = vlaneseq
        %v348 = vshrl.u32 %v347, 7
        %vm349 = vcmp.eq.s32.totalorder %v348, 0
        %v350 = vsel %vm349, 1, 0
        %vm351 = vcmp.eq.s32.totalorder %v350, 1
        %v352 = vperm.slane %v343, 0
        %v353 = vperm.slane %v346, 0
        %v356 = vsel %vm351, %v352, %v314
        %v357 = vsel %vm351, %v353, %v315
        %358 = vst [vmem:[%s180] sm:$0xff] %v356
        %359 = vst [vmem:[%s180 + $0x8] sm:$0xff] %v357
        %s360 = sand.u32 %s98, 1
        %s361 = scalar_lea.sflag [#allocation3], %s360
        %s362 = sand.u32 %s98, 1
        %s363 = smul.addr %s362, 16
        %s364 = scalar_lea.vmem [#allocation2], %s363
        // Predicated region
        $region33: #{tpu_custom_call.1} parent=31 // pred_check
          %p365 = pneg %p108
        $region34: #{tpu_custom_call.1} parent=31 // pred_check_branch
          %367 = sbr.rel (%p365) target = $region36
        $region35: #{tpu_custom_call.1} parent=31 // pred_region
          %s368 = smul.u32 2, %s17
          %370 = vsyncadd %s361, 0
          %s371 = smul.addr %s368, 8
          %s372 = scalar_lea.hbm %s3, %s371
          %s373 = sshll.u32 %s364, 4
          %s374 = int_to_ptr.vmem [resolvable:$true] %s373
          %s375 = sshll.u32 %s372, 4
          %s376 = int_to_ptr.hbm [resolvable:$true] %s375
          %381 = dma.vmem_to_hbm [thread:$0]  %s374, 256, %s376, %s361, 128, 128, 8
        $region36: #{tpu_custom_call.1} parent=31 // pred_fallthru
          _
      $region32: #{tpu_custom_call.1} parent=5 // pred_fallthru
        _
      %p382 = scmp.le.s32.totalorder 2, %s12
      // Predicated region
      $region37: #{tpu_custom_call.1} parent=5 // pred_check
        %p383 = pneg %p382
      $region38: #{tpu_custom_call.1} parent=5 // pred_check_branch
        %385 = sbr.rel (%p383) target = $region40
      $region39: #{tpu_custom_call.1} parent=5 // pred_region
        %s386 = ssub.s32 %s12, 2
        // Predicated region
        $region41: #{tpu_custom_call.1} parent=39 // pred_check
          %p387 = pneg %p114
        $region42: #{tpu_custom_call.1} parent=39 // pred_check_branch
          %389 = sbr.rel (%p387) target = $region44
        $region43: #{tpu_custom_call.1} parent=39 // pred_region
          %s390 = sand.u32 %s99, 1
          %s391 = scalar_lea.sflag [#allocation3], %s390
          %s392 = sand.u32 %s99, 1
          %s393 = smul.addr %s392, 16
          %s394 = scalar_lea.vmem [#allocation2], %s393
          %396 = dma.done %s391, 256
        $region44: #{tpu_custom_call.1} parent=39 // pred_fallthru
          _
      $region40: #{tpu_custom_call.1} parent=5 // pred_fallthru
        _
    $region6: #{tpu_custom_call.1} parent=1 // loop_footer
      %s16 = sadd.s32 1, %s12
    $region7: #{tpu_custom_call.1} parent=1 // loop_footer_branch
      %11 = sbr.rel target = $region3
    $region8: #{tpu_custom_call.1} parent=1 // loop_exit
      _
    %397 = vsyncpa [#allocation3], 1
    %s398 = scalar_lea.sflag [#allocation3], 1
    %399 = vsyncpa %s398, 1

</llo_original>
